<compile_context>
chip_gen: v5e
topology: v5e:2x2
jax: 0.10.0
libtpu: 0.0.40
codegen_flags: <defaults>
</compile_context>

<pallas_src>
import functools

import jax
import jax.numpy as jnp
from jax.experimental import pallas as pl
from jax.experimental.pallas import tpu as pltpu


_LANE = 128
_MXU = 256           # v6e / v7x MXU edge; also a multiple of v5e's 128.
_SUBLANE_BF16 = 16   # bf16 packs 16 rows per vreg.


def _round_up(x: int, m: int) -> int:
    return ((x + m - 1) // m) * m


def _vmem_capacity_bytes() -> int:
    """Physical VMEM per TensorCore; conservative fallback if unqueryable."""
    try:
        return int(pltpu.get_tpu_info().vmem_capacity_bytes)
    except Exception:
        return 64 * 1024 * 1024   # v7x per-TC size (smallest of v5e/v6e/v7x)


def _step_vmem_bytes(tm: int, nv_p: int, tn: int) -> int:
    """Per-grid-step VMEM footprint (blocks counted double-buffered)."""
    v_bytes = 2 * tm * nv_p * 2        # v tile, bf16
    w_bytes = 2 * nv_p * tn * 2        # w chunk, bf16
    out_bytes = 2 * tm * nv_p * 4      # pvh output tile / accumulator, f32
    bias_bytes = 2 * (nv_p + tn) * 4   # a, b
    return v_bytes + w_bytes + out_bytes + bias_bytes


def _pick_tm(B: int, tm_max: int) -> int:
    """Batch tile: minimize padding, prefer >=2 tiles (megacore), then larger."""
    cap = min(tm_max, _round_up(B, _SUBLANE_BF16))
    cands = sorted({c for c in (256, 192, 128, 96, 64) if c <= cap} | {cap})

    def score(tm):
        b_pad = _round_up(B, tm)
        n_tiles = b_pad // tm
        return (b_pad, 0 if n_tiles >= 2 else 1, -tm)

    return min(cands, key=score)


def rbm_fwd_kernel(v_ref, w_ref, a_ref, b_ref, out_ref, *, single_chunk):
    """One (batch-tile, nh-chunk) step of the fused two-matmul RBM forward.

    v_ref:   [TM, nv_p]   bf16   batch tile, full (padded) visible dim
    w_ref:   [nv_p, TN]   bf16   nh-chunk of the weight matrix
    a_ref:   [1, nv_p]    f32    visible bias
    b_ref:   [1, TN]      f32    hidden-bias chunk
    out_ref: [TM, nv_p]   f32    pvh tile; doubles as the accumulator
                                 (resident across the nh-chunk grid axis)
    """
    # phv_chunk = relu(v @ w_chunk + b_chunk)      -> [TM, TN], f32
    phv = jnp.maximum(
        jnp.dot(v_ref[...], w_ref[...], preferred_element_type=jnp.float32)
        + b_ref[...],
        0.0,
    )

    # contrib = phv_chunk @ w_chunk.T as an NT contraction (no explicit
    # transpose of w, no extra [TN, nv_p] VMEM copy).
    contrib = jax.lax.dot_general(
        phv.astype(w_ref.dtype),
        w_ref[...],
        dimension_numbers=(((1,), (1,)), ((), ())),
        preferred_element_type=jnp.float32,
    )

    if single_chunk:
        # grid_j == 1: single fused store, no accumulator traffic at all.
        out_ref[...] = jnp.maximum(contrib + a_ref[...], 0.0)
    else:
        j = pl.program_id(1)

        @pl.when(j == 0)
        def _first():
            # Seed the accumulator with the visible bias folded in: no
            # zero-fill pass; finalize is just an in-place ReLU.
            out_ref[...] = contrib + a_ref[...]

        @pl.when(j > 0)
        def _accumulate():
            out_ref[...] += contrib

        @pl.when(j == pl.num_programs(1) - 1)
        def _finalize():
            out_ref[...] = jnp.maximum(out_ref[...], 0.0)


@functools.partial(jax.jit, static_argnames=("tm_max",))
def rbm_forward(v, w, a, b, *, tm_max=256):
    """RBM.forward(v) with k=0 CD steps; returns pvh of shape [B, nv] (f32)."""
    B, nv = v.shape
    nv_w, nh = w.shape
    assert nv == nv_w

    compute_dtype = jnp.bfloat16

    # ---- tile / padding selection ------------------------------------------
    nv_p = _round_up(nv, _MXU)
    nh_p = _round_up(nh, _MXU)
    tm = _pick_tm(B, tm_max)

    capacity = _vmem_capacity_bytes()
    budget = max(capacity - (12 << 20), 24 << 20)  # leave Mosaic headroom

    # Keep the whole weight matrix VMEM-resident (grid_j == 1) when it fits;
    # otherwise shrink the nh chunk, then the batch tile.
    tn = nh_p
    while _step_vmem_bytes(tm, nv_p, tn) > budget and tn > _MXU:
        tn = max(_MXU, _round_up(tn // 2, _MXU))
    while _step_vmem_bytes(tm, nv_p, tn) > budget and tm > _SUBLANE_BF16:
        tm = max(_SUBLANE_BF16, _round_up(tm // 2, _SUBLANE_BF16))
    # TODO(synk): nv is kept un-tiled; extremely large visible dims would need
    # an additional visible-dim grid axis on top of this layout.

    nh_p = _round_up(nh_p, tn)        # pad nh so tn divides it exactly
    b_pad = _round_up(B, tm)
    grid = (b_pad // tm, nh_p // tn)
    grid_i, grid_j = grid

    # ---- padded operands -----------------------------------------------------
    # Zero padding is semantics-preserving: padded hidden columns give
    # relu(0 + 0) = 0 and contribute nothing to the second matmul; padded
    # visible columns / batch rows are sliced off below.
    v_p = (
        jnp.zeros((b_pad, nv_p), dtype=compute_dtype)
        .at[:B, :nv]
        .set(v.astype(compute_dtype))
    )
    w_p = (
        jnp.zeros((nv_p, nh_p), dtype=compute_dtype)
        .at[:nv, :nh]
        .set(w.astype(compute_dtype))
    )
    a_p = jnp.zeros((1, nv_p), jnp.float32).at[0, :nv].set(a.astype(jnp.float32))
    b_p2 = jnp.zeros((1, nh_p), jnp.float32).at[0, :nh].set(b.astype(jnp.float32))

    # ---- VMEM limit & cost estimate ------------------------------------------
    step_bytes = _step_vmem_bytes(tm, nv_p, tn)
    vmem_limit = int(min(capacity - (4 << 20),
                         max(step_bytes + (4 << 20), 32 << 20)))

    # w is re-streamed once per batch tile only when grid_j > 1 (its block
    # index then changes between consecutive grid steps); once total otherwise.
    w_reads = 1 if grid_j == 1 else grid_i
    cost = pl.CostEstimate(
        flops=2 * 2 * b_pad * nv_p * nh_p,  # two matmuls
        transcendentals=0,
        bytes_accessed=(
            v_p.size * 2
            + w_reads * w_p.size * 2
            + a_p.size * 4
            + b_p2.size * 4
            + b_pad * nv_p * 4  # output writeback
        ),
    )

    out_p = pl.pallas_call(
        functools.partial(rbm_fwd_kernel, single_chunk=(grid_j == 1)),
        out_shape=jax.ShapeDtypeStruct((b_pad, nv_p), jnp.float32),
        grid=grid,
        in_specs=[
            pl.BlockSpec((tm, nv_p), lambda i, j: (i, 0)),   # v tile
            pl.BlockSpec((nv_p, tn), lambda i, j: (0, j)),   # w chunk
            pl.BlockSpec((1, nv_p), lambda i, j: (0, 0)),    # a (resident)
            pl.BlockSpec((1, tn), lambda i, j: (0, j)),      # b chunk
        ],
        out_specs=pl.BlockSpec((tm, nv_p), lambda i, j: (i, 0)),
        compiler_params=pltpu.CompilerParams(
            dimension_semantics=("parallel", "arbitrary"),
            vmem_limit_bytes=vmem_limit,
        ),
        cost_estimate=cost,
    )(v_p, w_p, a_p, b_p2)

    return out_p[:B, :nv]


def rbm_forward_ref(v, w, a, b):
    """Pure-JAX reference matching the kernel's numerics (bf16 in, f32 acc)."""
    vc = v.astype(jnp.bfloat16)
    wc = w.astype(jnp.bfloat16)
    phv = jnp.maximum(
        jnp.dot(vc, wc, preferred_element_type=jnp.float32) + b, 0.0
    )
    pvh = jnp.maximum(
        jax.lax.dot_general(
            phv.astype(jnp.bfloat16),
            wc,
            dimension_numbers=(((1,), (1,)), ((), ())),
            preferred_element_type=jnp.float32,
        )
        + a,
        0.0,
    )
    return pvh


def rbm_forward_ref_f32(v, w, a, b):
    """Full-precision reference (loose sanity check for the bf16 path)."""
    phv = jnp.maximum(v @ w + b, 0.0)
    pvh = jnp.maximum(phv @ w.T + a, 0.0)
    return pvh


if __name__ == "__main__":
    key = jax.random.PRNGKey(0)
    kw, kv = jax.random.split(key)

    # Small, module-consistent shapes: nv visible units, nh hidden units.
    B, nv, nh = 8, 16, 32

    # torch.nn.Parameter-equivalent init: w = randn(nv, nh) * 0.01,
    # a = zeros(nv), b = zeros(nh).
    w = jax.random.normal(kw, (nv, nh), dtype=jnp.float32) * 0.01
    a = jnp.zeros((nv,), dtype=jnp.float32)
    b = jnp.zeros((nh,), dtype=jnp.float32)

    # Input batch of visible units.
    v = jax.random.normal(kv, (B, nv), dtype=jnp.float32)

    out = rbm_forward(v, w, a, b)
    out = jax.block_until_ready(out)
    assert out.shape == (B, nv)

    # Exact-path check (same bf16-input / f32-accumulate math as the kernel).
    ref = rbm_forward_ref(v, w, a, b)
    assert jnp.allclose(out, ref, atol=1e-4, rtol=1e-4)

    # Loose sanity check against full-f32 math (bf16 input rounding only).
    ref32 = rbm_forward_ref_f32(v, w, a, b)
    assert jnp.allclose(out, ref32, atol=1e-3, rtol=1e-1)

    print("KERNEL_OK")
</pallas_src>

<mosaic_0001>
module attributes {stable_mosaic.version = 11 : i64} {
  func.func @rbm_fwd_kernel(%arg0: i32, %arg1: i32, %arg2: memref<16x256xbf16, #tpu.memory_space<vmem>>, %arg3: memref<256x256xbf16, #tpu.memory_space<vmem>>, %arg4: memref<1x256xf32, #tpu.memory_space<vmem>>, %arg5: memref<1x256xf32, #tpu.memory_space<vmem>>, %arg6: memref<16x256xf32, #tpu.memory_space<vmem>>) attributes {dimension_semantics = [#tpu.dimension_semantics<parallel>, #tpu.dimension_semantics<arbitrary>], iteration_bounds = array<i64: 1, 1>, scalar_prefetch = 0 : i64, scratch_operands = 0 : i64, tpu.core_type = #tpu.core_type<tc>, window_params = [{transform_indices = @transform_0, window_bounds = array<i64: 16, 256>}, {transform_indices = @transform_1, window_bounds = array<i64: 256, 256>}, {pipeline_mode = #tpu.pipeline_mode<synchronous>, transform_indices = @transform_2, window_bounds = array<i64: 1, 256>}, {transform_indices = @transform_3, window_bounds = array<i64: 1, 256>}, {transform_indices = @transform_4, window_bounds = array<i64: 16, 256>}]} {
    %c0 = arith.constant 0 : index
    %c0_0 = arith.constant 0 : index
    %0 = vector.load %arg2[%c0, %c0_0] : memref<16x256xbf16, #tpu.memory_space<vmem>>, vector<16x256xbf16>
    %c0_1 = arith.constant 0 : index
    %c0_2 = arith.constant 0 : index
    %1 = vector.load %arg3[%c0_1, %c0_2] : memref<256x256xbf16, #tpu.memory_space<vmem>>, vector<256x256xbf16>
    %cst = arith.constant dense<0.000000e+00> : vector<16x256xf32>
    %2 = tpu.matmul %0, %1, %cst {dimension_numbers = #tpu.dot_dimension_numbers<[1], [0], [0], [1], [0, 0, 1, 1], [], []>} : vector<16x256xbf16>, vector<256x256xbf16>, vector<16x256xf32> -> vector<16x256xf32>
    %c0_3 = arith.constant 0 : index
    %c0_4 = arith.constant 0 : index
    %3 = vector.load %arg5[%c0_3, %c0_4] : memref<1x256xf32, #tpu.memory_space<vmem>>, vector<1x256xf32>
    %4 = vector.broadcast %3 : vector<1x256xf32> to vector<16x256xf32>
    %5 = arith.addf %2, %4 : vector<16x256xf32>
    %cst_5 = arith.constant 0.000000e+00 : f32
    %6 = vector.broadcast %cst_5 : f32 to vector<16x256xf32>
    %7 = arith.maximumf %5, %6 : vector<16x256xf32>
    %8 = arith.truncf %7 : vector<16x256xf32> to vector<16x256xbf16>
    %c0_6 = arith.constant 0 : index
    %c0_7 = arith.constant 0 : index
    %9 = vector.load %arg3[%c0_6, %c0_7] : memref<256x256xbf16, #tpu.memory_space<vmem>>, vector<256x256xbf16>
    %cst_8 = arith.constant dense<0.000000e+00> : vector<16x256xf32>
    %10 = tpu.matmul %8, %9, %cst_8 {dimension_numbers = #tpu.dot_dimension_numbers<[1], [1], [0], [0], [0, 0, 1, 0], [], []>} : vector<16x256xbf16>, vector<256x256xbf16>, vector<16x256xf32> -> vector<16x256xf32>
    %c0_9 = arith.constant 0 : index
    %c0_10 = arith.constant 0 : index
    %11 = vector.load %arg4[%c0_9, %c0_10] : memref<1x256xf32, #tpu.memory_space<vmem>>, vector<1x256xf32>
    %12 = vector.broadcast %11 : vector<1x256xf32> to vector<16x256xf32>
    %13 = arith.addf %10, %12 : vector<16x256xf32>
    %cst_11 = arith.constant 0.000000e+00 : f32
    %14 = vector.broadcast %cst_11 : f32 to vector<16x256xf32>
    %15 = arith.maximumf %13, %14 : vector<16x256xf32>
    %c0_12 = arith.constant 0 : index
    %c0_13 = arith.constant 0 : index
    %16 = vector.load %arg6[%c0_12, %c0_13] : memref<16x256xf32, #tpu.memory_space<vmem>>, vector<16x256xf32>
    tpu.vector_store %arg6[%c0_12, %c0_13], %15 {strides = array<i32>} : memref<16x256xf32, #tpu.memory_space<vmem>>, vector<16x256xf32>,
    return
  }
  func.func @transform_0(%arg0: i32, %arg1: i32) -> (i32, i32) {
    %c0_i32 = arith.constant 0 : i32
    %c0_i32_0 = arith.constant 0 : i32
    return %arg0, %c0_i32 : i32, i32
  }
  func.func @transform_1(%arg0: i32, %arg1: i32) -> (i32, i32) {
    %c0_i32 = arith.constant 0 : i32
    %c0_i32_0 = arith.constant 0 : i32
    return %c0_i32, %arg1 : i32, i32
  }
  func.func @transform_2(%arg0: i32, %arg1: i32) -> (i32, i32) {
    %c0_i32 = arith.constant 0 : i32
    %c0_i32_0 = arith.constant 0 : i32
    %c0_i32_1 = arith.constant 0 : i32
    return %c0_i32, %c0_i32_0 : i32, i32
  }
  func.func @transform_3(%arg0: i32, %arg1: i32) -> (i32, i32) {
    %c0_i32 = arith.constant 0 : i32
    %c0_i32_0 = arith.constant 0 : i32
    return %c0_i32, %arg1 : i32, i32
  }
  func.func @transform_4(%arg0: i32, %arg1: i32) -> (i32, i32) {
    %c0_i32 = arith.constant 0 : i32
    %c0_i32_0 = arith.constant 0 : i32
    return %arg0, %c0_i32 : i32, i32
  }
}

</mosaic_0001>

<llo_original>
// kernel: rbm_forward.1
$region0: #{rbm_forward.1}
  #allocation0 [shape = 'u32[]', space=smem, size = 0x4, offset = 0x4, fixed_abs, tag = 'smem constant byte address 0x4 - core index']
  #allocation1 [shape = 'u32[72,128]{1,0:T(1,128)}', space=vmem, size = 0x9000, scoped, tag = 'internal scratch']
  %s0 = inlined_call_operand.vmem [shape: bf16[16,256], index: 0, kind: input, shape index: {}]
  %s1 = inlined_call_operand.vmem [shape: bf16[256,256], index: 1, kind: input, shape index: {}]
  %s2 = inlined_call_operand.vmem [shape: f32[1,256], index: 2, kind: input, shape index: {}]
  %s3 = inlined_call_operand.vmem [shape: f32[1,256], index: 3, kind: input, shape index: {}]
  %s4 = inlined_call_operand.vmem [shape: f32[16,256], index: 4, kind: output, shape index: {}]
  %s5 = sld [smem:[#allocation0]]
  $region26: #{rbm_forward.1} parent=0
    _
  %s7 = ssub.s32 1, %s5
  %s8 = scalar_select 0, %s7, %s5
  // Predicated region
  $region2: #{rbm_forward.1} parent=0 // pred_check
    _
  $region3: #{rbm_forward.1} parent=0 // pred_check_branch
    %10 = sbr.rel (0) target = $region5
  $region4: #{rbm_forward.1} parent=0 // pred_region
    _
  $region5: #{rbm_forward.1} parent=0 // pred_fallthru
    _
  // Predicated region
  $region6: #{rbm_forward.1} parent=0 // pred_check
    _
  $region7: #{rbm_forward.1} parent=0 // pred_check_branch
    %12 = sbr.rel (0) target = $region9
  $region8: #{rbm_forward.1} parent=0 // pred_region
    _
  $region9: #{rbm_forward.1} parent=0 // pred_fallthru
    _
  // Predicated region
  $region10: #{rbm_forward.1} parent=0 // pred_check
    _
  $region11: #{rbm_forward.1} parent=0 // pred_check_branch
    %14 = sbr.rel (0) target = $region13
  $region12: #{rbm_forward.1} parent=0 // pred_region
    _
  $region13: #{rbm_forward.1} parent=0 // pred_fallthru
    _
  // Predicated region
  $region14: #{rbm_forward.1} parent=0 // pred_check
    _
  $region15: #{rbm_forward.1} parent=0 // pred_check_branch
    %16 = sbr.rel (0) target = $region17
  $region16: #{rbm_forward.1} parent=0 // pred_region
    _
  $region17: #{rbm_forward.1} parent=0 // pred_fallthru
    _
  %v17 = vld [vmem:[%s0] sm:$0xff]
  %v18 = vld [vmem:[%s0 + $0x8] sm:$0xff]
  %v19 = vld [vmem:[%s1] sm:$0xff]
  %v20 = vld [vmem:[%s1 + $0x8] sm:$0xff]
  %v21 = vld [vmem:[%s1 + $0x10] sm:$0xff]
  %v22 = vld [vmem:[%s1 + $0x18] sm:$0xff]
  %v23 = vld [vmem:[%s1 + $0x20] sm:$0xff]
  %v24 = vld [vmem:[%s1 + $0x28] sm:$0xff]
  %v25 = vld [vmem:[%s1 + $0x30] sm:$0xff]
  %v26 = vld [vmem:[%s1 + $0x38] sm:$0xff]
  %v27 = vld [vmem:[%s1 + $0x40] sm:$0xff]
  %v28 = vld [vmem:[%s1 + $0x48] sm:$0xff]
  %v29 = vld [vmem:[%s1 + $0x50] sm:$0xff]
  %v30 = vld [vmem:[%s1 + $0x58] sm:$0xff]
  %v31 = vld [vmem:[%s1 + $0x60] sm:$0xff]
  %v32 = vld [vmem:[%s1 + $0x68] sm:$0xff]
  %v33 = vld [vmem:[%s1 + $0x70] sm:$0xff]
  %v34 = vld [vmem:[%s1 + $0x78] sm:$0xff]
  %v35 = vld [vmem:[%s1 + $0x80] sm:$0xff]
  %v36 = vld [vmem:[%s1 + $0x88] sm:$0xff]
  %v37 = vld [vmem:[%s1 + $0x90] sm:$0xff]
  %v38 = vld [vmem:[%s1 + $0x98] sm:$0xff]
  %v39 = vld [vmem:[%s1 + $0xa0] sm:$0xff]
  %v40 = vld [vmem:[%s1 + $0xa8] sm:$0xff]
  %v41 = vld [vmem:[%s1 + $0xb0] sm:$0xff]
  %v42 = vld [vmem:[%s1 + $0xb8] sm:$0xff]
  %v43 = vld [vmem:[%s1 + $0xc0] sm:$0xff]
  %v44 = vld [vmem:[%s1 + $0xc8] sm:$0xff]
  %v45 = vld [vmem:[%s1 + $0xd0] sm:$0xff]
  %v46 = vld [vmem:[%s1 + $0xd8] sm:$0xff]
  %v47 = vld [vmem:[%s1 + $0xe0] sm:$0xff]
  %v48 = vld [vmem:[%s1 + $0xe8] sm:$0xff]
  %v49 = vld [vmem:[%s1 + $0xf0] sm:$0xff]
  %v50 = vld [vmem:[%s1 + $0xf8] sm:$0xff]
  %v51 = vld [vmem:[%s3] sm:$0x3]
  %v53 = vperm.slane %v51, 0
  %v54 = vperm.slane %v51, 1
  %v59 = vunpack.c.l.b16 %v17
  %v60 = vunpack.c.h.b16 %v17
  %v61 = vunpack.c.l.b16 %v18
  %v62 = vunpack.c.h.b16 %v18
  %v63 = vpack.c.b16 %v61, %v59
  %v64 = vpack.c.b16 %v62, %v60
  %v99 = vunpack.c.l.b16 %v19
  %v100 = vunpack.c.h.b16 %v19
  %v101 = vunpack.c.l.b16 %v20
  %v102 = vunpack.c.h.b16 %v20
  %v103 = vunpack.c.l.b16 %v21
  %v104 = vunpack.c.h.b16 %v21
  %v105 = vunpack.c.l.b16 %v22
  %v106 = vunpack.c.h.b16 %v22
  %v107 = vunpack.c.l.b16 %v23
  %v108 = vunpack.c.h.b16 %v23
  %v109 = vunpack.c.l.b16 %v24
  %v110 = vunpack.c.h.b16 %v24
  %v111 = vunpack.c.l.b16 %v25
  %v112 = vunpack.c.h.b16 %v25
  %v113 = vunpack.c.l.b16 %v26
  %v114 = vunpack.c.h.b16 %v26
  %v115 = vunpack.c.l.b16 %v27
  %v116 = vunpack.c.h.b16 %v27
  %v117 = vunpack.c.l.b16 %v28
  %v118 = vunpack.c.h.b16 %v28
  %v119 = vunpack.c.l.b16 %v29
  %v120 = vunpack.c.h.b16 %v29
  %v121 = vunpack.c.l.b16 %v30
  %v122 = vunpack.c.h.b16 %v30
  %v123 = vunpack.c.l.b16 %v31
  %v124 = vunpack.c.h.b16 %v31
  %v125 = vunpack.c.l.b16 %v32
  %v126 = vunpack.c.h.b16 %v32
  %v127 = vunpack.c.l.b16 %v33
  %v128 = vunpack.c.h.b16 %v33
  %v129 = vunpack.c.l.b16 %v34
  %v130 = vunpack.c.h.b16 %v34
  %v131 = vunpack.c.l.b16 %v35
  %v132 = vunpack.c.h.b16 %v35
  %v133 = vunpack.c.l.b16 %v36
  %v134 = vunpack.c.h.b16 %v36
  %v135 = vunpack.c.l.b16 %v37
  %v136 = vunpack.c.h.b16 %v37
  %v137 = vunpack.c.l.b16 %v38
  %v138 = vunpack.c.h.b16 %v38
  %v139 = vunpack.c.l.b16 %v39
  %v140 = vunpack.c.h.b16 %v39
  %v141 = vunpack.c.l.b16 %v40
  %v142 = vunpack.c.h.b16 %v40
  %v143 = vunpack.c.l.b16 %v41
  %v144 = vunpack.c.h.b16 %v41
  %v145 = vunpack.c.l.b16 %v42
  %v146 = vunpack.c.h.b16 %v42
  %v147 = vunpack.c.l.b16 %v43
  %v148 = vunpack.c.h.b16 %v43
  %v149 = vunpack.c.l.b16 %v44
  %v150 = vunpack.c.h.b16 %v44
  %v151 = vunpack.c.l.b16 %v45
  %v152 = vunpack.c.h.b16 %v45
  %v153 = vunpack.c.l.b16 %v46
  %v154 = vunpack.c.h.b16 %v46
  %v155 = vunpack.c.l.b16 %v47
  %v156 = vunpack.c.h.b16 %v47
  %v157 = vunpack.c.l.b16 %v48
  %v158 = vunpack.c.h.b16 %v48
  %v159 = vunpack.c.l.b16 %v49
  %v160 = vunpack.c.h.b16 %v49
  %v161 = vunpack.c.l.b16 %v50
  %v162 = vunpack.c.h.b16 %v50
  %v163 = vpack.c.b16 %v101, %v99
  %v164 = vpack.c.b16 %v102, %v100
  %v165 = vpack.c.b16 %v105, %v103
  %v166 = vpack.c.b16 %v106, %v104
  %v167 = vpack.c.b16 %v109, %v107
  %v168 = vpack.c.b16 %v110, %v108
  %v169 = vpack.c.b16 %v113, %v111
  %v170 = vpack.c.b16 %v114, %v112
  %v171 = vpack.c.b16 %v117, %v115
  %v172 = vpack.c.b16 %v118, %v116
  %v173 = vpack.c.b16 %v121, %v119
  %v174 = vpack.c.b16 %v122, %v120
  %v175 = vpack.c.b16 %v125, %v123
  %v176 = vpack.c.b16 %v126, %v124
  %v177 = vpack.c.b16 %v129, %v127
  %v178 = vpack.c.b16 %v130, %v128
  %v179 = vpack.c.b16 %v133, %v131
  %v180 = vpack.c.b16 %v134, %v132
  %v181 = vpack.c.b16 %v137, %v135
  %v182 = vpack.c.b16 %v138, %v136
  %v183 = vpack.c.b16 %v141, %v139
  %v184 = vpack.c.b16 %v142, %v140
  %v185 = vpack.c.b16 %v145, %v143
  %v186 = vpack.c.b16 %v146, %v144
  %v187 = vpack.c.b16 %v149, %v147
  %v188 = vpack.c.b16 %v150, %v148
  %v189 = vpack.c.b16 %v153, %v151
  %v190 = vpack.c.b16 %v154, %v152
  %v191 = vpack.c.b16 %v157, %v155
  %v192 = vpack.c.b16 %v158, %v156
  %v193 = vpack.c.b16 %v161, %v159
  %v194 = vpack.c.b16 %v162, %v160
  %227 = vmatpush.bf16.msra.mxu0 %v177
  %228 = vmatpush.bf16.msra.mxu0 %v175
  %229 = vmatpush.bf16.msra.mxu0 %v173
  %230 = vmatpush.bf16.msra.mxu0 %v171
  %231 = vmatpush.bf16.msra.mxu0 %v169
  %232 = vmatpush.bf16.msra.mxu0 %v167
  %233 = vmatpush.bf16.msra.mxu0 %v165
  %234 = vmatpush.bf16.msra.mxu0 %v163
  %235 = vmatmul.bf16.gmra.mxu0 %v63
  %v236 = vpop.f32.mrf.mxu0
  %v237 = vadd.f32 %v53, %v236
  %v238 = vpop.f32.mrf.mxu0
  %v239 = vadd.f32 %v53, %v238
  %240 = vdwg.mxu0
  %241 = vmatpush.bf16.msra.mxu0 %v193
  %242 = vmatpush.bf16.msra.mxu0 %v191
  %243 = vmatpush.bf16.msra.mxu0 %v189
  %244 = vmatpush.bf16.msra.mxu0 %v187
  %245 = vmatpush.bf16.msra.mxu0 %v185
  %246 = vmatpush.bf16.msra.mxu0 %v183
  %247 = vmatpush.bf16.msra.mxu0 %v181
  %248 = vmatpush.bf16.msra.mxu0 %v179
  %249 = vmatmul.bf16.gmra.mxu0 %v64
  %v250 = vpop.f32.mrf.mxu0
  %v251 = vadd.f32 %v237, %v250
  %v252 = vpop.f32.mrf.mxu0
  %v253 = vadd.f32 %v239, %v252
  %254 = vdwg.mxu0
  %255 = vmatpush.bf16.msra.mxu0 %v178
  %256 = vmatpush.bf16.msra.mxu0 %v176
  %257 = vmatpush.bf16.msra.mxu0 %v174
  %258 = vmatpush.bf16.msra.mxu0 %v172
  %259 = vmatpush.bf16.msra.mxu0 %v170
  %260 = vmatpush.bf16.msra.mxu0 %v168
  %261 = vmatpush.bf16.msra.mxu0 %v166
  %262 = vmatpush.bf16.msra.mxu0 %v164
  %263 = vmatmul.bf16.gmra.mxu0 %v63
  %v264 = vpop.f32.mrf.mxu0
  %v265 = vadd.f32 %v54, %v264
  %v266 = vpop.f32.mrf.mxu0
  %v267 = vadd.f32 %v54, %v266
  %268 = vdwg.mxu0
  %269 = vmatpush.bf16.msra.mxu0 %v194
  %270 = vmatpush.bf16.msra.mxu0 %v192
  %271 = vmatpush.bf16.msra.mxu0 %v190
  %272 = vmatpush.bf16.msra.mxu0 %v188
  %273 = vmatpush.bf16.msra.mxu0 %v186
  %274 = vmatpush.bf16.msra.mxu0 %v184
  %275 = vmatpush.bf16.msra.mxu0 %v182
  %276 = vmatpush.bf16.msra.mxu0 %v180
  %277 = vmatmul.bf16.gmra.mxu0 %v64
  %v278 = vpop.f32.mrf.mxu0
  %v279 = vadd.f32 %v265, %v278
  %v280 = vpop.f32.mrf.mxu0
  %v281 = vadd.f32 %v267, %v280
  %282 = vdwg.mxu0
  %v283 = vmax.f32 %v251, 0.0
  %v284 = vmax.f32 %v279, 0.0
  %v285 = vmax.f32 %v253, 0.0
  %v286 = vmax.f32 %v281, 0.0
  %v287 = vpack.c.bf16 %v285, %v283
  %v288 = vpack.c.bf16 %v286, %v284
  %v289 = vld [vmem:[%s2] sm:$0x3]
  %v291 = vperm.slane %v289, 0
  %v292 = vperm.slane %v289, 1
  %295 = vmatpush.bf16.xpose.msra.mxu0 %v177
  %296 = vmatpush.bf16.xpose.msra.mxu0 %v175
  %297 = vmatpush.bf16.xpose.msra.mxu0 %v173
  %298 = vmatpush.bf16.xpose.msra.mxu0 %v171
  %299 = vmatpush.bf16.xpose.msra.mxu0 %v169
  %300 = vmatpush.bf16.xpose.msra.mxu0 %v167
  %301 = vmatpush.bf16.xpose.msra.mxu0 %v165
  %302 = vmatpush.bf16.xpose.msra.mxu0 %v163
  %303 = vmatmul.bf16.gmra.mxu0 %v287
  %v304 = vpop.f32.mrf.mxu0
  %v305 = vadd.f32 %v291, %v304
  %v306 = vpop.f32.mrf.mxu0
  %v307 = vadd.f32 %v291, %v306
  %308 = vdwg.mxu0
  %309 = vmatpush.bf16.xpose.msra.mxu0 %v178
  %310 = vmatpush.bf16.xpose.msra.mxu0 %v176
  %311 = vmatpush.bf16.xpose.msra.mxu0 %v174
  %312 = vmatpush.bf16.xpose.msra.mxu0 %v172
  %313 = vmatpush.bf16.xpose.msra.mxu0 %v170
  %314 = vmatpush.bf16.xpose.msra.mxu0 %v168
  %315 = vmatpush.bf16.xpose.msra.mxu0 %v166
  %316 = vmatpush.bf16.xpose.msra.mxu0 %v164
  %317 = vmatmul.bf16.gmra.mxu0 %v288
  %v318 = vpop.f32.mrf.mxu0
  %v319 = vadd.f32 %v305, %v318
  %v320 = vpop.f32.mrf.mxu0
  %v321 = vadd.f32 %v307, %v320
  %322 = vdwg.mxu0
  %323 = vmatpush.bf16.xpose.msra.mxu0 %v193
  %324 = vmatpush.bf16.xpose.msra.mxu0 %v191
  %325 = vmatpush.bf16.xpose.msra.mxu0 %v189
  %326 = vmatpush.bf16.xpose.msra.mxu0 %v187
  %327 = vmatpush.bf16.xpose.msra.mxu0 %v185
  %328 = vmatpush.bf16.xpose.msra.mxu0 %v183
  %329 = vmatpush.bf16.xpose.msra.mxu0 %v181
  %330 = vmatpush.bf16.xpose.msra.mxu0 %v179
  %331 = vmatmul.bf16.gmra.mxu0 %v287
  %v332 = vpop.f32.mrf.mxu0
  %v333 = vadd.f32 %v292, %v332
  %v334 = vpop.f32.mrf.mxu0
  %v335 = vadd.f32 %v292, %v334
  %336 = vdwg.mxu0
  %337 = vmatpush.bf16.xpose.msra.mxu0 %v194
  %338 = vmatpush.bf16.xpose.msra.mxu0 %v192
  %339 = vmatpush.bf16.xpose.msra.mxu0 %v190
  %340 = vmatpush.bf16.xpose.msra.mxu0 %v188
  %341 = vmatpush.bf16.xpose.msra.mxu0 %v186
  %342 = vmatpush.bf16.xpose.msra.mxu0 %v184
  %343 = vmatpush.bf16.xpose.msra.mxu0 %v182
  %344 = vmatpush.bf16.xpose.msra.mxu0 %v180
  %345 = vmatmul.bf16.gmra.mxu0 %v288
  %v346 = vpop.f32.mrf.mxu0
  %v347 = vadd.f32 %v333, %v346
  %v348 = vpop.f32.mrf.mxu0
  %v349 = vadd.f32 %v335, %v348
  %350 = vdwg.mxu0
  %v351 = vmax.f32 %v319, 0.0
  %v352 = vmax.f32 %v347, 0.0
  %v353 = vmax.f32 %v321, 0.0
  %v354 = vmax.f32 %v349, 0.0
  %355 = vst [vmem:[%s4] sm:$0xff] %v351
  %356 = vst [vmem:[%s4 + $0x8] sm:$0xff] %v352
  %357 = vst [vmem:[%s4 + $0x10] sm:$0xff] %v353
  %358 = vst [vmem:[%s4 + $0x18] sm:$0xff] %v354
  // Predicated region
  $region18: #{rbm_forward.1} parent=0 // pred_check
    _
  $region19: #{rbm_forward.1} parent=0 // pred_check_branch
    %360 = sbr.rel (0) target = $region21
  $region20: #{rbm_forward.1} parent=0 // pred_region
    _
  $region21: #{rbm_forward.1} parent=0 // pred_fallthru
    _
  // Predicated region
  $region22: #{rbm_forward.1} parent=0 // pred_check
    _
  $region23: #{rbm_forward.1} parent=0 // pred_check_branch
    %362 = sbr.rel (0) target = $region25
  $region24: #{rbm_forward.1} parent=0 // pred_region
    _
  $region25: #{rbm_forward.1} parent=0 // pred_fallthru
    _

</llo_original>
